<compile_context>
chip_gen: v7x
topology: tpu7x:2x2x1
jax: 0.10.0
libtpu: 0.0.40
codegen_flags: <defaults>
</compile_context>

<pallas_src>
import jax
import jax.numpy as jnp
from jax import lax
from jax.experimental import pallas as pl
from jax.experimental.pallas import tpu as pltpu


LANE = 128          # TPU lane width
BF16_SUBLANE = 16   # sublane packing granularity for bf16 rows


def _round_up(x, m):
    return (x + m - 1) // m * m


def _conv_tap_kernel(t_ref, w_ref, b_ref, o_ref, acc_ref):
    """One (TM, Cout_p) output tile, accumulated over the 9 conv taps.

    Grid = (M_tiles, 9); axis 1 (taps) is the innermost reduction axis.
      t_ref  : (1, TM, Cin_p)      bf16  tap `k`, row tile `i`
      w_ref  : (1, Cin_p, Cout_p)  bf16  tap `k` weight matrix
      b_ref  : (1, Cout_p)         f32   bias
      o_ref  : (TM, Cout_p)        out dtype
      acc_ref: (TM, Cout_p)        f32 VMEM accumulator (scratch)
    """
    k = pl.program_id(1)

    @pl.when(k == 0)
    def _():
        acc_ref[...] = jnp.zeros_like(acc_ref)

    acc_ref[...] += jnp.dot(t_ref[0], w_ref[0],
                            preferred_element_type=jnp.float32)

    @pl.when(k == pl.num_programs(1) - 1)
    def _():
        # Bias is added exactly once, in the finalize step.
        o_ref[...] = (acc_ref[...] + b_ref[...]).astype(o_ref.dtype)


def downsample_nhwc(x, weight, bias, *, tm=256):
    """Downsample forward, NHWC in / NHWC out (preferred, lane-dense path).

    x:      (N, H, W, C) float32
    weight: (C, C, 3, 3) float32  (C_out, C_in, kh, kw — PyTorch Conv2d layout)
    bias:   (C,)         float32
    returns (N, Ho + 1, Wo + 1, C) with Ho = (H - 3)//2 + 1, Wo = (W - 3)//2 + 1
    """
    N, H, W, C = x.shape
    Co, Ci, KH, KW = weight.shape
    assert (Co, Ci, KH, KW) == (C, C, 3, 3)

    Ho = (H - 3) // 2 + 1
    Wo = (W - 3) // 2 + 1
    M = N * Ho * Wo

    Cin_p = _round_up(C, LANE)
    Cout_p = _round_up(C, LANE)

    TM = min(tm, _round_up(M, BF16_SUBLANE))
    TM = _round_up(TM, BF16_SUBLANE)
    Mp = _round_up(M, TM)

    # --- 9 strided NHWC tap views (no im2col matrix, no big transpose) -------
    taps = []
    for kh in range(3):
        for kw in range(3):
            t = x[:, kh:kh + 2 * Ho:2, kw:kw + 2 * Wo:2, :]   # (N, Ho, Wo, C)
            taps.append(t.reshape(M, C))
    taps = jnp.stack(taps, axis=0)                            # (9, M, C), k = kh*3 + kw
    taps = jnp.pad(taps, ((0, 0), (0, Mp - M), (0, Cin_p - C))).astype(jnp.bfloat16)

    # Per-tap (Cin, Cout) weight matrices, same k = kh*3 + kw flattening.
    w_taps = weight.transpose(2, 3, 1, 0).reshape(9, C, C)    # (9, Cin, Cout)
    w_taps = jnp.pad(w_taps, ((0, 0), (0, Cin_p - C), (0, Cout_p - C))).astype(jnp.bfloat16)

    b_mat = jnp.pad(bias.astype(jnp.float32), (0, Cout_p - C)).reshape(1, Cout_p)

    grid = (Mp // TM, 9)   # (parallel row tiles, arbitrary tap reduction — last)

    out = pl.pallas_call(
        _conv_tap_kernel,
        out_shape=jax.ShapeDtypeStruct((Mp, Cout_p), x.dtype),
        grid_spec=pltpu.PrefetchScalarGridSpec(
            num_scalar_prefetch=0,
            grid=grid,
            in_specs=[
                pl.BlockSpec((1, TM, Cin_p), lambda i, k: (k, i, 0)),      # taps
                pl.BlockSpec((1, Cin_p, Cout_p), lambda i, k: (k, 0, 0)),  # weights
                pl.BlockSpec((1, Cout_p), lambda i, k: (0, 0)),            # bias
            ],
            out_specs=pl.BlockSpec((TM, Cout_p), lambda i, k: (i, 0)),
            scratch_shapes=[pltpu.VMEM((TM, Cout_p), jnp.float32)],
        ),
        compiler_params=pltpu.CompilerParams(
            dimension_semantics=("parallel", "arbitrary"),
            vmem_limit_bytes=48 * 1024 * 1024,
        ),
    )(taps, w_taps, b_mat)

    y = out[:M, :C].reshape(N, Ho, Wo, C)                     # NHWC, valid region
    # ConstantPad2d((0, 1, 0, 1), 0): pad right & bottom of the spatial dims.
    # TODO(synk): could be folded into the kernel's output tiles (pre-zeroed
    # aliased output); kept as a tiny XLA pad since it is small vs. the conv.
    y = jnp.pad(y, ((0, 0), (0, 1), (0, 1), (0, 0)))
    return y


def downsample(x, weight, bias, *, tm=256):
    """NCHW adapter for PyTorch layout parity.

    Prefer downsample_nhwc directly to keep data lane-dense NHWC end to end —
    the two transposes here exist only to match torch's NCHW convention.
    """
    x_nhwc = jnp.transpose(x, (0, 2, 3, 1))
    y_nhwc = downsample_nhwc(x_nhwc, weight, bias, tm=tm)
    return jnp.transpose(y_nhwc, (0, 3, 1, 2))


if __name__ == "__main__":
    key = jax.random.PRNGKey(0)
    kx, kw, kb = jax.random.split(key, 3)

    N, C, H, W = 2, 4, 16, 16
    x = jax.random.normal(kx, (N, C, H, W), dtype=jnp.float32)

    # Deterministic parameter init (PyTorch-default-like uniform(-1/sqrt(fan_in), +)).
    fan_in = C * 3 * 3
    bound = 1.0 / (fan_in ** 0.5)
    weight = jax.random.uniform(kw, (C, C, 3, 3), jnp.float32, -bound, bound)
    bias = jax.random.uniform(kb, (C,), jnp.float32, -bound, bound)

    y = jax.jit(downsample)(x, weight, bias)
    y = jax.block_until_ready(y)

    # Reference 1: exact module semantics (f32 conv + pad). Loose tol (bf16 operands).
    y_f32 = lax.conv_general_dilated(
        x, weight, window_strides=(2, 2), padding="VALID",
        dimension_numbers=("NCHW", "OIHW", "NCHW"),
    ) + bias.reshape(1, C, 1, 1)
    y_f32 = jnp.pad(y_f32, ((0, 0), (0, 0), (0, 1), (0, 1)))

    # Reference 2: same bf16-operand / f32-accumulate numerics as the kernel. Tight tol.
    xb = x.astype(jnp.bfloat16).astype(jnp.float32)
    wb = weight.astype(jnp.bfloat16).astype(jnp.float32)
    y_bf16 = lax.conv_general_dilated(
        xb, wb, window_strides=(2, 2), padding="VALID",
        dimension_numbers=("NCHW", "OIHW", "NCHW"),
    ) + bias.reshape(1, C, 1, 1)
    y_bf16 = jnp.pad(y_bf16, ((0, 0), (0, 0), (0, 1), (0, 1)))

    Ho = (H - 3) // 2 + 1
    assert y.shape == (N, C, Ho + 1, Ho + 1), y.shape
    assert jnp.allclose(y, y_bf16, atol=1e-3, rtol=1e-3), "mismatch vs bf16-matched reference"
    assert jnp.allclose(y, y_f32, atol=5e-2, rtol=5e-2), "mismatch vs f32 reference"
    print("KERNEL_OK")
</pallas_src>

<mosaic_0001>
module attributes {stable_mosaic.version = 11 : i64} {
  func.func @_conv_tap_kernel(%arg0: i32, %arg1: i32, %arg2: memref<1x112x128xbf16, #tpu.memory_space<vmem>>, %arg3: memref<1x128x128xbf16, #tpu.memory_space<vmem>>, %arg4: memref<1x128xf32, #tpu.memory_space<vmem>>, %arg5: memref<112x128xf32, #tpu.memory_space<vmem>>, %arg6: memref<112x128xf32, #tpu.memory_space<vmem>>) attributes {dimension_semantics = [#tpu.dimension_semantics<parallel>, #tpu.dimension_semantics<arbitrary>], iteration_bounds = array<i64: 1, 9>, scalar_prefetch = 0 : i64, scratch_operands = 1 : i64, tpu.core_type = #tpu.core_type<tc>, window_params = [{transform_indices = @transform_0, window_bounds = array<i64: 1, 112, 128>}, {transform_indices = @transform_1, window_bounds = array<i64: 1, 128, 128>}, {pipeline_mode = #tpu.pipeline_mode<synchronous>, transform_indices = @transform_2, window_bounds = array<i64: 1, 128>}, {transform_indices = @transform_3, window_bounds = array<i64: 112, 128>}]} {
    %c0_i32 = arith.constant 0 : i32
    %0 = arith.cmpi eq, %arg1, %c0_i32 : i32
    %1 = arith.extui %0 : i1 to i32
    %c0_i32_0 = arith.constant 0 : i32
    %2 = arith.cmpi ne, %1, %c0_i32_0 : i32
    scf.if %2 {
      %cst_11 = arith.constant 0.000000e+00 : f32
      %14 = vector.broadcast %cst_11 : f32 to vector<112x128xf32>
      %c0_12 = arith.constant 0 : index
      %c0_13 = arith.constant 0 : index
      %15 = vector.load %arg6[%c0_12, %c0_13] : memref<112x128xf32, #tpu.memory_space<vmem>>, vector<112x128xf32>
      tpu.vector_store %arg6[%c0_12, %c0_13], %14 {strides = array<i32>} : memref<112x128xf32, #tpu.memory_space<vmem>>, vector<112x128xf32>,
    } else {
    }
    %c0 = arith.constant 0 : index
    %c0_1 = arith.constant 0 : index
    %3 = vector.load %arg6[%c0, %c0_1] : memref<112x128xf32, #tpu.memory_space<vmem>>, vector<112x128xf32>
    %c0_2 = arith.constant 0 : index
    %c0_3 = arith.constant 0 : index
    %c0_4 = arith.constant 0 : index
    %4 = vector.load %arg2[%c0_2, %c0_3, %c0_4] : memref<1x112x128xbf16, #tpu.memory_space<vmem>>, vector<1x112x128xbf16>
    %5 = vector.shape_cast %4 : vector<1x112x128xbf16> to vector<112x128xbf16>
    %c0_5 = arith.constant 0 : index
    %c0_6 = arith.constant 0 : index
    %c0_7 = arith.constant 0 : index
    %6 = vector.load %arg3[%c0_5, %c0_6, %c0_7] : memref<1x128x128xbf16, #tpu.memory_space<vmem>>, vector<1x128x128xbf16>
    %7 = vector.shape_cast %6 : vector<1x128x128xbf16> to vector<128x128xbf16>
    %cst = arith.constant dense<0.000000e+00> : vector<112x128xf32>
    %8 = tpu.matmul %5, %7, %cst {dimension_numbers = #tpu.dot_dimension_numbers<[1], [0], [0], [1], [0, 0, 1, 1], [], []>} : vector<112x128xbf16>, vector<128x128xbf16>, vector<112x128xf32> -> vector<112x128xf32>
    %9 = arith.addf %3, %8 : vector<112x128xf32>
    %c0_8 = arith.constant 0 : index
    %c0_9 = arith.constant 0 : index
    %10 = vector.load %arg6[%c0_8, %c0_9] : memref<112x128xf32, #tpu.memory_space<vmem>>, vector<112x128xf32>
    tpu.vector_store %arg6[%c0_8, %c0_9], %9 {strides = array<i32>} : memref<112x128xf32, #tpu.memory_space<vmem>>, vector<112x128xf32>,
    %c8_i32 = arith.constant 8 : i32
    %11 = arith.cmpi eq, %arg1, %c8_i32 : i32
    %12 = arith.extui %11 : i1 to i32
    %c0_i32_10 = arith.constant 0 : i32
    %13 = arith.cmpi ne, %12, %c0_i32_10 : i32
    scf.if %13 {
      %c0_11 = arith.constant 0 : index
      %c0_12 = arith.constant 0 : index
      %14 = vector.load %arg6[%c0_11, %c0_12] : memref<112x128xf32, #tpu.memory_space<vmem>>, vector<112x128xf32>
      %c0_13 = arith.constant 0 : index
      %c0_14 = arith.constant 0 : index
      %15 = vector.load %arg4[%c0_13, %c0_14] : memref<1x128xf32, #tpu.memory_space<vmem>>, vector<1x128xf32>
      %16 = vector.broadcast %15 : vector<1x128xf32> to vector<112x128xf32>
      %17 = arith.addf %14, %16 : vector<112x128xf32>
      %c0_15 = arith.constant 0 : index
      %c0_16 = arith.constant 0 : index
      %18 = vector.load %arg5[%c0_15, %c0_16] : memref<112x128xf32, #tpu.memory_space<vmem>>, vector<112x128xf32>
      tpu.vector_store %arg5[%c0_15, %c0_16], %17 {strides = array<i32>} : memref<112x128xf32, #tpu.memory_space<vmem>>, vector<112x128xf32>,
    } else {
    }
    return
  }
  func.func @transform_0(%arg0: i32, %arg1: i32) -> (i32, i32, i32) {
    %c0_i32 = arith.constant 0 : i32
    %c0_i32_0 = arith.constant 0 : i32
    return %arg1, %arg0, %c0_i32 : i32, i32, i32
  }
  func.func @transform_1(%arg0: i32, %arg1: i32) -> (i32, i32, i32) {
    %c0_i32 = arith.constant 0 : i32
    %c0_i32_0 = arith.constant 0 : i32
    %c0_i32_1 = arith.constant 0 : i32
    return %arg1, %c0_i32, %c0_i32_0 : i32, i32, i32
  }
  func.func @transform_2(%arg0: i32, %arg1: i32) -> (i32, i32) {
    %c0_i32 = arith.constant 0 : i32
    %c0_i32_0 = arith.constant 0 : i32
    %c0_i32_1 = arith.constant 0 : i32
    return %c0_i32, %c0_i32_0 : i32, i32
  }
  func.func @transform_3(%arg0: i32, %arg1: i32) -> (i32, i32) {
    %c0_i32 = arith.constant 0 : i32
    %c0_i32_0 = arith.constant 0 : i32
    return %arg0, %c0_i32 : i32, i32
  }
}

</mosaic_0001>

<llo_original>
// kernel: downsample.1
$region0: #{downsample.1}
  #allocation0 [shape = 'u32[]', space=smem, size = 0x4, offset = 0x4, fixed_abs, tag = 'smem constant byte address 0x4 - core index']
  #allocation1 [shape = 'u32[144,128]{1,0:T(1,128)}', space=vmem, size = 0x12000, scoped, tag = 'internal scratch']
  #allocation2 [shape = 'f32[112,128]{1,0:T(8,128)}', space=vmem, size = 0xe000, scoped, tag = 'scratch operand']
  %s0 = inlined_call_operand.vmem [shape: bf16[9,112,128], index: 0, kind: input, shape index: {}]
  %s1 = inlined_call_operand.vmem [shape: bf16[9,128,128], index: 1, kind: input, shape index: {}]
  %s2 = inlined_call_operand.vmem [shape: f32[1,128], index: 2, kind: input, shape index: {}]
  %s3 = inlined_call_operand.vmem [shape: f32[112,128], index: 3, kind: output, shape index: {}]
  %s4 = sld [smem:[#allocation0]]
  $region53: #{downsample.1} parent=0
    _
  %s6 = ssub.s32 1, %s4
  %s7 = scalar_select 0, %s6, %s4
  loop: start=0, step=1, limit=11
  $region2: #{downsample.1} parent=0 // loop_pre_header
    _
  $region3: #{downsample.1} parent=0 // loop_header
    %s9 = sphi 0, %s13
    %p10 = scmp.ge.s32.totalorder %s9, 11
    %s16 = sphi 0, %s28
    %s17 = sphi 0, %s24
    %s18 = sphi 0, %s16
    %s19 = sphi 0, %s17
    %s20 = sphi 0, %s18
    %s21 = sphi 0, %s19
    %s33 = sphi 0, %s35
    %s36 = sphi 0, %s33
    %s37 = sphi 0, %s36
    %s53 = sphi 0, %s37
    %s59 = sphi 0, %s61
    %s62 = sphi 0, %s59
    %s63 = sphi 0, %s62
    %s79 = sphi 0, %s63
    %s83 = sphi 0, %s83
    %s85 = sphi 0, %s83
    %s86 = sphi 0, %s85
    %s100 = sphi 0, %s86
    %s106 = sphi 0, %s108
    %s109 = sphi 0, %s106
    %s110 = sphi 0, %s109
    %s126 = sphi 0, %s110
  $region4: #{downsample.1} parent=0 // loop_header_branch
    %12 = sbr.rel (%p10) target = $region8
  $region5: #{downsample.1} parent=0 // loop_body
    %s14 = ssub.s32 %s9, 1
    %s15 = ssub.s32 %s9, 2
    %s22 = sadd.s32 1, %s17
    %p23 = scmp.ge.s32.totalorder %s22, 9
    %s24 = scalar_select %p23, 0, %s22
    %s25 = sadd.s32 1, %s16
    %s26 = scalar_select %p23, %s25, %s16
    %p27 = scmp.ge.s32.totalorder %s26, 1
    %s28 = scalar_select %p27, 0, %s26
    %s29 = ssub.s32 %s17, %s24
    %s30 = ssub.s32 %s16, %s28
    %s31 = sor.u32 %s29, %s30
    %p32 = scmp.eq.s32.totalorder %s31, 0
    %s34 = sadd.s32 %s33, 1
    %s35 = scalar_select %p32, %s33, %s34
    %p38 = pneg %p32
    %p39 = scmp.eq.s32.totalorder %s9, 8
    %p40 = por %p38, %p39
    %p41 = scmp.ne.s32.totalorder %s33, %s36
    %p42 = scmp.eq.s32.totalorder %s9, 0
    %p43 = por %p41, %p42
    %p44 = scmp.ne.s32.totalorder %s33, %s36
    %p45 = scmp.eq.s32.totalorder %s14, 8
    %p46 = por %p44, %p45
    %p47 = scmp.ne.s32.totalorder %s36, %s37
    %p48 = scmp.eq.s32.totalorder %s14, 0
    %p49 = por %p47, %p48
    %p50 = scmp.ne.s32.totalorder %s36, %s37
    %p51 = scmp.eq.s32.totalorder %s15, 8
    %p52 = por %p50, %p51
    %p54 = scmp.ne.s32.totalorder %s37, %s53
    %p55 = scmp.eq.s32.totalorder %s15, 0
    %p56 = por %p54, %p55
    %s57 = ssub.s32 %s17, %s24
    %p58 = scmp.eq.s32.totalorder %s57, 0
    %s60 = sadd.s32 %s59, 1
    %s61 = scalar_select %p58, %s59, %s60
    %p64 = pneg %p58
    %p65 = scmp.eq.s32.totalorder %s9, 8
    %p66 = por %p64, %p65
    %p67 = scmp.ne.s32.totalorder %s59, %s62
    %p68 = scmp.eq.s32.totalorder %s9, 0
    %p69 = por %p67, %p68
    %p70 = scmp.ne.s32.totalorder %s59, %s62
    %p71 = scmp.eq.s32.totalorder %s14, 8
    %p72 = por %p70, %p71
    %p73 = scmp.ne.s32.totalorder %s62, %s63
    %p74 = scmp.eq.s32.totalorder %s14, 0
    %p75 = por %p73, %p74
    %p76 = scmp.ne.s32.totalorder %s62, %s63
    %p77 = scmp.eq.s32.totalorder %s15, 8
    %p78 = por %p76, %p77
    %p80 = scmp.ne.s32.totalorder %s63, %s79
    %p81 = scmp.eq.s32.totalorder %s15, 0
    %p82 = por %p80, %p81
    %s84 = sadd.s32 %s83, 1
    %p87 = scmp.eq.s32.totalorder %s9, 8
    %p88 = scmp.ne.s32.totalorder %s83, %s85
    %p89 = scmp.eq.s32.totalorder %s9, 0
    %p90 = por %p88, %p89
    %p91 = scmp.ne.s32.totalorder %s83, %s85
    %p92 = scmp.eq.s32.totalorder %s14, 8
    %p93 = por %p91, %p92
    %p94 = scmp.ne.s32.totalorder %s85, %s86
    %p95 = scmp.eq.s32.totalorder %s14, 0
    %p96 = por %p94, %p95
    %p97 = scmp.ne.s32.totalorder %s85, %s86
    %p98 = scmp.eq.s32.totalorder %s15, 8
    %p99 = por %p97, %p98
    %p101 = scmp.ne.s32.totalorder %s86, %s100
    %p102 = scmp.eq.s32.totalorder %s15, 0
    %p103 = por %p101, %p102
    %s104 = ssub.s32 %s16, %s28
    %p105 = scmp.eq.s32.totalorder %s104, 0
    %s107 = sadd.s32 %s106, 1
    %s108 = scalar_select %p105, %s106, %s107
    %p111 = pneg %p105
    %p112 = scmp.eq.s32.totalorder %s9, 8
    %p113 = por %p111, %p112
    %p114 = scmp.ne.s32.totalorder %s106, %s109
    %p115 = scmp.eq.s32.totalorder %s9, 0
    %p116 = por %p114, %p115
    %p117 = scmp.ne.s32.totalorder %s106, %s109
    %p118 = scmp.eq.s32.totalorder %s14, 8
    %p119 = por %p117, %p118
    %p120 = scmp.ne.s32.totalorder %s109, %s110
    %p121 = scmp.eq.s32.totalorder %s14, 0
    %p122 = por %p120, %p121
    %p123 = scmp.ne.s32.totalorder %s109, %s110
    %p124 = scmp.eq.s32.totalorder %s15, 8
    %p125 = por %p123, %p124
    %p127 = scmp.ne.s32.totalorder %s110, %s126
    %p128 = scmp.eq.s32.totalorder %s15, 0
    %p129 = por %p127, %p128
    %p130 = scmp.le.s32.totalorder 1, %s9
    %p131 = scmp.lt.s32.totalorder %s9, 10
    %p132 = pnand %p130, %p131
    %p133 = pneg %p132
    // Predicated region
    $region9: #{downsample.1} parent=5 // pred_check
      _
    $region10: #{downsample.1} parent=5 // pred_check_branch
      %135 = sbr.rel (%p132) target = $region12
    $region11: #{downsample.1} parent=5 // pred_region
      %s136 = ssub.s32 %s9, 1
      // Predicated region
      $region13: #{downsample.1} parent=11 // pred_check
        %p137 = pneg %p96
      $region14: #{downsample.1} parent=11 // pred_check_branch
        %139 = sbr.rel (%p137) target = $region16
      $region15: #{downsample.1} parent=11 // pred_region
        _
      $region16: #{downsample.1} parent=11 // pred_fallthru
        _
    $region12: #{downsample.1} parent=5 // pred_fallthru
      _
    %p140 = scmp.lt.s32.totalorder %s9, 9
    // Predicated region
    $region17: #{downsample.1} parent=5 // pred_check
      %p141 = pneg %p140
    $region18: #{downsample.1} parent=5 // pred_check_branch
      %143 = sbr.rel (%p141) target = $region20
    $region19: #{downsample.1} parent=5 // pred_region
      // Predicated region
      $region21: #{downsample.1} parent=19 // pred_check
        %p144 = pneg %p43
      $region22: #{downsample.1} parent=19 // pred_check_branch
        %146 = sbr.rel (%p144) target = $region24
      $region23: #{downsample.1} parent=19 // pred_region
        %s147 = smul.u32 14, %s16
        %p148 = scmp.lt.s32.totalorder %s17, 8
        %s149 = scalar_select %p148, %s17, 8
        %p150 = scmp.lt.s32.totalorder %s147, 13
        %s151 = scalar_select %p150, %s147, 13
        %s152 = smul.addr %s149, 14
        %s153 = sadd.s32 %s151, %s152
        %s154 = smul.addr %s153, 4
        %s155 = scalar_lea.vmem %s0, %s154
        %s156 = smul.u32 14, %s16
      $region24: #{downsample.1} parent=19 // pred_fallthru
        _
      // Predicated region
      $region25: #{downsample.1} parent=19 // pred_check
        %p157 = pneg %p69
      $region26: #{downsample.1} parent=19 // pred_check_branch
        %159 = sbr.rel (%p157) target = $region28
      $region27: #{downsample.1} parent=19 // pred_region
        %p160 = scmp.lt.s32.totalorder %s17, 8
        %s161 = scalar_select %p160, %s17, 8
        %s162 = smul.addr %s161, 16
        %s163 = smul.addr %s162, 4
        %s164 = scalar_lea.vmem %s1, %s163
      $region28: #{downsample.1} parent=19 // pred_fallthru
        _
    $region20: #{downsample.1} parent=5 // pred_fallthru
      _
    %p165 = scmp.le.s32.totalorder 1, %s9
    %p166 = scmp.lt.s32.totalorder %s9, 10
    %p167 = pnand %p165, %p166
    %p168 = pneg %p167
    // Predicated region
    $region29: #{downsample.1} parent=5 // pred_check
      _
    $region30: #{downsample.1} parent=5 // pred_check_branch
      %170 = sbr.rel (%p167) target = $region32
    $region31: #{downsample.1} parent=5 // pred_region
      %s171 = ssub.s32 %s9, 1
      %s172 = smul.u32 14, %s18
      %p173 = scmp.lt.s32.totalorder %s19, 8
      %s174 = scalar_select %p173, %s19, 8
      %p175 = scmp.lt.s32.totalorder %s172, 13
      %s176 = scalar_select %p175, %s172, 13
      %s177 = smul.addr %s174, 14
      %s178 = sadd.s32 %s176, %s177
      %s179 = smul.addr %s178, 4
      %s180 = scalar_lea.vmem %s0, %s179
      %p181 = pneg %p49
      %p182 = pneg %p46
      %p183 = scmp.lt.s32.totalorder %s19, 8
      %s184 = scalar_select %p183, %s19, 8
      %s185 = smul.addr %s184, 16
      %s186 = smul.addr %s185, 4
      %s187 = scalar_lea.vmem %s1, %s186
      %p188 = pneg %p75
      %p189 = pneg %p72
      %p190 = pneg %p96
      %p191 = pneg %p93
      %p192 = pneg %p122
      %p193 = pneg %p119
      %s194 = smul.u32 14, %s18
      %p195 = scmp.lt.s32.totalorder %s194, 13
      %s196 = scalar_select %p195, %s194, 13
      %s197 = smul.addr %s196, 8
      %s198 = scalar_lea.vmem %s3, %s197
      %s199 = smul.u32 14, %s18
      %p200 = scmp.lt.s32.totalorder %s19, 8
      %s201 = scalar_select %p200, %s19, 8
      %p202 = scmp.lt.s32.totalorder %s199, 13
      %s203 = scalar_select %p202, %s199, 13
      %s204 = smul.addr %s201, 14
      %s205 = sadd.s32 %s203, %s204
      %s206 = smul.addr %s205, 4
      %s207 = scalar_lea.vmem %s0, %s206
      %s208 = smul.u32 14, %s18
      %p209 = scmp.lt.s32.totalorder %s19, 8
      %s210 = scalar_select %p209, %s19, 8
      %s211 = smul.addr %s210, 16
      %s212 = smul.addr %s211, 4
      %s213 = scalar_lea.vmem %s1, %s212
      %s214 = smul.u32 14, %s18
      %p215 = scmp.lt.s32.totalorder %s214, 13
      %s216 = scalar_select %p215, %s214, 13
      %s217 = smul.addr %s216, 8
      %s218 = scalar_lea.vmem %s3, %s217
      %s219 = smul.u32 14, %s18
      %p221 = scmp.eq.s32.totalorder %s19, 0
      // Predicated region
      $region33: #{downsample.1} parent=31 // pred_check
        %p222 = pneg %p221
      $region34: #{downsample.1} parent=31 // pred_check_branch
        %224 = sbr.rel (%p222) target = $region36
      $region35: #{downsample.1} parent=31 // pred_region
        %225 = vst [vmem:[#allocation2] sm:$0xff] 0.0
        %226 = vst [vmem:[#allocation2 + $0x8] sm:$0xff] 0.0
        %227 = vst [vmem:[#allocation2 + $0x10] sm:$0xff] 0.0
        %228 = vst [vmem:[#allocation2 + $0x18] sm:$0xff] 0.0
        %229 = vst [vmem:[#allocation2 + $0x20] sm:$0xff] 0.0
        %230 = vst [vmem:[#allocation2 + $0x28] sm:$0xff] 0.0
        %231 = vst [vmem:[#allocation2 + $0x30] sm:$0xff] 0.0
        %232 = vst [vmem:[#allocation2 + $0x38] sm:$0xff] 0.0
        %233 = vst [vmem:[#allocation2 + $0x40] sm:$0xff] 0.0
        %234 = vst [vmem:[#allocation2 + $0x48] sm:$0xff] 0.0
        %235 = vst [vmem:[#allocation2 + $0x50] sm:$0xff] 0.0
        %236 = vst [vmem:[#allocation2 + $0x58] sm:$0xff] 0.0
        %237 = vst [vmem:[#allocation2 + $0x60] sm:$0xff] 0.0
        %238 = vst [vmem:[#allocation2 + $0x68] sm:$0xff] 0.0
      $region36: #{downsample.1} parent=31 // pred_fallthru
        _
      %v239 = vld [vmem:[#allocation2] sm:$0xff]
      %v240 = vld [vmem:[#allocation2 + $0x8] sm:$0xff]
      %v241 = vld [vmem:[#allocation2 + $0x10] sm:$0xff]
      %v242 = vld [vmem:[#allocation2 + $0x18] sm:$0xff]
      %v243 = vld [vmem:[#allocation2 + $0x20] sm:$0xff]
      %v244 = vld [vmem:[#allocation2 + $0x28] sm:$0xff]
      %v245 = vld [vmem:[#allocation2 + $0x30] sm:$0xff]
      %v246 = vld [vmem:[#allocation2 + $0x38] sm:$0xff]
      %v247 = vld [vmem:[#allocation2 + $0x40] sm:$0xff]
      %v248 = vld [vmem:[#allocation2 + $0x48] sm:$0xff]
      %v249 = vld [vmem:[#allocation2 + $0x50] sm:$0xff]
      %v250 = vld [vmem:[#allocation2 + $0x58] sm:$0xff]
      %v251 = vld [vmem:[#allocation2 + $0x60] sm:$0xff]
      %v252 = vld [vmem:[#allocation2 + $0x68] sm:$0xff]
      %v253 = vld [vmem:[%s207] sm:$0xf]
      %v254 = vld [vmem:[%s207 + $0x4] sm:$0xf]
      %v255 = vld [vmem:[%s207 + $0x8] sm:$0xf]
      %v256 = vld [vmem:[%s207 + $0xc] sm:$0xf]
      %v257 = vld [vmem:[%s207 + $0x10] sm:$0xf]
      %v258 = vld [vmem:[%s207 + $0x14] sm:$0xf]
      %v259 = vld [vmem:[%s207 + $0x18] sm:$0xf]
      %v260 = vld [vmem:[%s207 + $0x1c] sm:$0xf]
      %v261 = vld [vmem:[%s207 + $0x20] sm:$0xf]
      %v262 = vld [vmem:[%s207 + $0x24] sm:$0xf]
      %v263 = vld [vmem:[%s207 + $0x28] sm:$0xf]
      %v264 = vld [vmem:[%s207 + $0x2c] sm:$0xf]
      %v265 = vld [vmem:[%s207 + $0x30] sm:$0xf]
      %v266 = vld [vmem:[%s207 + $0x34] sm:$0xf]
      %v267 = vld [vmem:[%s213] sm:$0xf]
      %v268 = vld [vmem:[%s213 + $0x4] sm:$0xf]
      %v269 = vld [vmem:[%s213 + $0x8] sm:$0xf]
      %v270 = vld [vmem:[%s213 + $0xc] sm:$0xf]
      %v271 = vld [vmem:[%s213 + $0x10] sm:$0xf]
      %v272 = vld [vmem:[%s213 + $0x14] sm:$0xf]
      %v273 = vld [vmem:[%s213 + $0x18] sm:$0xf]
      %v274 = vld [vmem:[%s213 + $0x1c] sm:$0xf]
      %v275 = vld [vmem:[%s213 + $0x20] sm:$0xf]
      %v276 = vld [vmem:[%s213 + $0x24] sm:$0xf]
      %v277 = vld [vmem:[%s213 + $0x28] sm:$0xf]
      %v278 = vld [vmem:[%s213 + $0x2c] sm:$0xf]
      %v279 = vld [vmem:[%s213 + $0x30] sm:$0xf]
      %v280 = vld [vmem:[%s213 + $0x34] sm:$0xf]
      %v281 = vld [vmem:[%s213 + $0x38] sm:$0xf]
      %v282 = vld [vmem:[%s213 + $0x3c] sm:$0xf]
      %v297 = vunpack.c.l.b16 %v253
      %v298 = vunpack.c.l.b16 %v254
      %v299 = vunpack.c.l.b16 %v255
      %v300 = vunpack.c.l.b16 %v256
      %v301 = vunpack.c.l.b16 %v257
      %v302 = vunpack.c.l.b16 %v258
      %v303 = vunpack.c.l.b16 %v259
      %v304 = vunpack.c.l.b16 %v260
      %v305 = vunpack.c.l.b16 %v261
      %v306 = vunpack.c.l.b16 %v262
      %v307 = vunpack.c.l.b16 %v263
      %v308 = vunpack.c.l.b16 %v264
      %v309 = vunpack.c.l.b16 %v265
      %v310 = vunpack.c.l.b16 %v266
      %v311 = vpack.c.b16 %v298, %v297
      %v312 = vpack.c.b16 %v300, %v299
      %v313 = vpack.c.b16 %v302, %v301
      %v314 = vpack.c.b16 %v304, %v303
      %v315 = vpack.c.b16 %v306, %v305
      %v316 = vpack.c.b16 %v308, %v307
      %v317 = vpack.c.b16 %v310, %v309
      %v341 = vunpack.c.l.b16 %v267
      %v342 = vunpack.c.l.b16 %v268
      %v343 = vunpack.c.l.b16 %v269
      %v344 = vunpack.c.l.b16 %v270
      %v345 = vunpack.c.l.b16 %v271
      %v346 = vunpack.c.l.b16 %v272
      %v347 = vunpack.c.l.b16 %v273
      %v348 = vunpack.c.l.b16 %v274
      %v349 = vunpack.c.l.b16 %v275
      %v350 = vunpack.c.l.b16 %v276
      %v351 = vunpack.c.l.b16 %v277
      %v352 = vunpack.c.l.b16 %v278
      %v353 = vunpack.c.l.b16 %v279
      %v354 = vunpack.c.l.b16 %v280
      %v355 = vunpack.c.l.b16 %v281
      %v356 = vunpack.c.l.b16 %v282
      %v357 = vpack.c.b16 %v342, %v341
      %v358 = vpack.c.b16 %v344, %v343
      %v359 = vpack.c.b16 %v346, %v345
      %v360 = vpack.c.b16 %v348, %v347
      %v361 = vpack.c.b16 %v350, %v349
      %v362 = vpack.c.b16 %v352, %v351
      %v363 = vpack.c.b16 %v354, %v353
      %v364 = vpack.c.b16 %v356, %v355
      %373 = vmatprep.subr.bf16.mxu0 0
      %374 = vmatpush1.bf16.msra.mxu0 %v357
      %375 = vmatprep.subr.bf16.mxu0 0
      %376 = vmatpush1.bf16.msra.mxu0 %v358
      %377 = vmatprep.subr.bf16.mxu0 0
      %378 = vmatpush1.bf16.msra.mxu0 %v359
      %379 = vmatprep.subr.bf16.mxu0 0
      %380 = vmatpush1.bf16.msra.mxu0 %v360
      %381 = vmatprep.subr.bf16.mxu0 0
      %382 = vmatpush1.bf16.msra.mxu0 %v361
      %383 = vmatprep.subr.bf16.mxu0 0
      %384 = vmatpush1.bf16.msra.mxu0 %v362
      %385 = vmatprep.subr.bf16.mxu0 0
      %386 = vmatpush1.bf16.msra.mxu0 %v363
      %387 = vmatprep.subr.bf16.mxu0 0
      %388 = vmatpush1.bf16.msra.mxu0 %v364
      %389 = vmatprep.subr.bf16.mxu0 0
      %390 = vmatpush1.bf16.msra.mxu0 0
      %391 = vmatprep.subr.bf16.mxu0 0
      %392 = vmatpush1.bf16.msra.mxu0 0
      %393 = vmatprep.subr.bf16.mxu0 0
      %394 = vmatpush1.bf16.msra.mxu0 0
      %395 = vmatprep.subr.bf16.mxu0 0
      %396 = vmatpush1.bf16.msra.mxu0 0
      %397 = vmatprep.subr.bf16.mxu0 0
      %398 = vmatpush1.bf16.msra.mxu0 0
      %399 = vmatprep.subr.bf16.mxu0 0
      %400 = vmatpush1.bf16.msra.mxu0 0
      %401 = vmatprep.subr.bf16.mxu0 0
      %402 = vmatpush1.bf16.msra.mxu0 0
      %403 = vmatprep.subr.bf16.mxu0 0
      %404 = vmatpush1.bf16.msra.mxu0 0
      %405 = vmatprep.mubr.bf16.mxu0 0
      %406 = vmatmul.mubr.bf16.gmra.mrb[0].mxu0 %v311
      %v407 = vpop.f32.mrb[0].mxu0
      %v408 = vadd.f32 0.0, %v407
      %v409 = vpop.f32.mrb[0].mxu0
      %v410 = vpop.f32.mrb[0].mxu0
      %v411 = vadd.f32 0.0, %v410
      %v412 = vpop.f32.mrb[0].mxu0
      %413 = vmatprep.mubr.bf16.mxu0 0
      %414 = vmatmul.mubr.bf16.gmra.mrb[0].mxu0 %v312
      %v415 = vpop.f32.mrb[0].mxu0
      %v416 = vadd.f32 0.0, %v415
      %v417 = vpop.f32.mrb[0].mxu0
      %v418 = vpop.f32.mrb[0].mxu0
      %v419 = vadd.f32 0.0, %v418
      %v420 = vpop.f32.mrb[0].mxu0
      %421 = vmatprep.mubr.bf16.mxu0 0
      %422 = vmatmul.mubr.bf16.gmra.mrb[0].mxu0 %v313
      %v423 = vpop.f32.mrb[0].mxu0
      %v424 = vadd.f32 0.0, %v423
      %v425 = vpop.f32.mrb[0].mxu0
      %v426 = vpop.f32.mrb[0].mxu0
      %v427 = vadd.f32 0.0, %v426
      %v428 = vpop.f32.mrb[0].mxu0
      %429 = vmatprep.mubr.bf16.mxu0 0
      %430 = vmatmul.mubr.bf16.gmra.mrb[0].mxu0 %v314
      %v431 = vpop.f32.mrb[0].mxu0
      %v432 = vadd.f32 0.0, %v431
      %v433 = vpop.f32.mrb[0].mxu0
      %v434 = vpop.f32.mrb[0].mxu0
      %v435 = vadd.f32 0.0, %v434
      %v436 = vpop.f32.mrb[0].mxu0
      %437 = vmatprep.mubr.bf16.mxu0 0
      %438 = vmatmul.mubr.bf16.gmra.mrb[0].mxu0 %v315
      %v439 = vpop.f32.mrb[0].mxu0
      %v440 = vadd.f32 0.0, %v439
      %v441 = vpop.f32.mrb[0].mxu0
      %v442 = vpop.f32.mrb[0].mxu0
      %v443 = vadd.f32 0.0, %v442
      %v444 = vpop.f32.mrb[0].mxu0
      %445 = vmatprep.mubr.bf16.mxu0 0
      %446 = vmatmul.mubr.bf16.gmra.mrb[0].mxu0 %v316
      %v447 = vpop.f32.mrb[0].mxu0
      %v448 = vadd.f32 0.0, %v447
      %v449 = vpop.f32.mrb[0].mxu0
      %v450 = vpop.f32.mrb[0].mxu0
      %v451 = vadd.f32 0.0, %v450
      %v452 = vpop.f32.mrb[0].mxu0
      %453 = vmatprep.mubr.bf16.mxu0 0
      %454 = vmatmul.mubr.bf16.gmra.mrb[0].mxu0 %v317
      %v455 = vpop.f32.mrb[0].mxu0
      %v456 = vadd.f32 0.0, %v455
      %v457 = vpop.f32.mrb[0].mxu0
      %v458 = vpop.f32.mrb[0].mxu0
      %v459 = vadd.f32 0.0, %v458
      %v460 = vpop.f32.mrb[0].mxu0
      %461 = vdwg.mxu0
      %v462 = vadd.f32 %v239, %v408
      %v463 = vadd.f32 %v240, %v411
      %v464 = vadd.f32 %v241, %v416
      %v465 = vadd.f32 %v242, %v419
      %v466 = vadd.f32 %v243, %v424
      %v467 = vadd.f32 %v244, %v427
      %v468 = vadd.f32 %v245, %v432
      %v469 = vadd.f32 %v246, %v435
      %v470 = vadd.f32 %v247, %v440
      %v471 = vadd.f32 %v248, %v443
      %v472 = vadd.f32 %v249, %v448
      %v473 = vadd.f32 %v250, %v451
      %v474 = vadd.f32 %v251, %v456
      %v475 = vadd.f32 %v252, %v459
      %476 = vst [vmem:[#allocation2] sm:$0xff] %v462
      %477 = vst [vmem:[#allocation2 + $0x8] sm:$0xff] %v463
      %478 = vst [vmem:[#allocation2 + $0x10] sm:$0xff] %v464
      %479 = vst [vmem:[#allocation2 + $0x18] sm:$0xff] %v465
      %480 = vst [vmem:[#allocation2 + $0x20] sm:$0xff] %v466
      %481 = vst [vmem:[#allocation2 + $0x28] sm:$0xff] %v467
      %482 = vst [vmem:[#allocation2 + $0x30] sm:$0xff] %v468
      %483 = vst [vmem:[#allocation2 + $0x38] sm:$0xff] %v469
      %484 = vst [vmem:[#allocation2 + $0x40] sm:$0xff] %v470
      %485 = vst [vmem:[#allocation2 + $0x48] sm:$0xff] %v471
      %486 = vst [vmem:[#allocation2 + $0x50] sm:$0xff] %v472
      %487 = vst [vmem:[#allocation2 + $0x58] sm:$0xff] %v473
      %488 = vst [vmem:[#allocation2 + $0x60] sm:$0xff] %v474
      %489 = vst [vmem:[#allocation2 + $0x68] sm:$0xff] %v475
      %p490 = scmp.eq.s32.totalorder %s19, 8
      // Predicated region
      $region37: #{downsample.1} parent=31 // pred_check
        %p491 = pneg %p490
      $region38: #{downsample.1} parent=31 // pred_check_branch
        %493 = sbr.rel (%p491) target = $region40
      $region39: #{downsample.1} parent=31 // pred_region
        %v494 = vld [vmem:[#allocation2] sm:$0xff]
        %v495 = vld [vmem:[#allocation2 + $0x8] sm:$0xff]
        %v496 = vld [vmem:[#allocation2 + $0x10] sm:$0xff]
        %v497 = vld [vmem:[#allocation2 + $0x18] sm:$0xff]
        %v498 = vld [vmem:[#allocation2 + $0x20] sm:$0xff]
        %v499 = vld [vmem:[#allocation2 + $0x28] sm:$0xff]
        %v500 = vld [vmem:[#allocation2 + $0x30] sm:$0xff]
        %v501 = vld [vmem:[#allocation2 + $0x38] sm:$0xff]
        %v502 = vld [vmem:[#allocation2 + $0x40] sm:$0xff]
        %v503 = vld [vmem:[#allocation2 + $0x48] sm:$0xff]
        %v504 = vld [vmem:[#allocation2 + $0x50] sm:$0xff]
        %v505 = vld [vmem:[#allocation2 + $0x58] sm:$0xff]
        %v506 = vld [vmem:[#allocation2 + $0x60] sm:$0xff]
        %v507 = vld [vmem:[#allocation2 + $0x68] sm:$0xff]
        %v508 = vld [vmem:[%s2] sm:$0x1]
        %v510 = vlaneseq
        %v511 = vshrl.u32 %v510, 7
        %v512 = vsub.s32 0, %v511
        %v513 = vrot.slane %v508, %v512
        %v515 = vadd.f32 %v494, %v513
        %v516 = vadd.f32 %v495, %v513
        %v517 = vadd.f32 %v496, %v513
        %v518 = vadd.f32 %v497, %v513
        %v519 = vadd.f32 %v498, %v513
        %v520 = vadd.f32 %v499, %v513
        %v521 = vadd.f32 %v500, %v513
        %v522 = vadd.f32 %v501, %v513
        %v523 = vadd.f32 %v502, %v513
        %v524 = vadd.f32 %v503, %v513
        %v525 = vadd.f32 %v504, %v513
        %v526 = vadd.f32 %v505, %v513
        %v527 = vadd.f32 %v506, %v513
        %v528 = vadd.f32 %v507, %v513
        %529 = vst [vmem:[%s218] sm:$0xff] %v515
        %530 = vst [vmem:[%s218 + $0x8] sm:$0xff] %v516
        %531 = vst [vmem:[%s218 + $0x10] sm:$0xff] %v517
        %532 = vst [vmem:[%s218 + $0x18] sm:$0xff] %v518
        %533 = vst [vmem:[%s218 + $0x20] sm:$0xff] %v519
        %534 = vst [vmem:[%s218 + $0x28] sm:$0xff] %v520
        %535 = vst [vmem:[%s218 + $0x30] sm:$0xff] %v521
        %536 = vst [vmem:[%s218 + $0x38] sm:$0xff] %v522
        %537 = vst [vmem:[%s218 + $0x40] sm:$0xff] %v523
        %538 = vst [vmem:[%s218 + $0x48] sm:$0xff] %v524
        %539 = vst [vmem:[%s218 + $0x50] sm:$0xff] %v525
        %540 = vst [vmem:[%s218 + $0x58] sm:$0xff] %v526
        %541 = vst [vmem:[%s218 + $0x60] sm:$0xff] %v527
        %542 = vst [vmem:[%s218 + $0x68] sm:$0xff] %v528
      $region40: #{downsample.1} parent=31 // pred_fallthru
        _
      %s543 = smul.u32 14, %s18
      %p544 = scmp.lt.s32.totalorder %s543, 13
      %s545 = scalar_select %p544, %s543, 13
      %s546 = smul.addr %s545, 8
      %s547 = scalar_lea.vmem %s3, %s546
      // Predicated region
      $region41: #{downsample.1} parent=31 // pred_check
        %p548 = pneg %p119
      $region42: #{downsample.1} parent=31 // pred_check_branch
        %550 = sbr.rel (%p548) target = $region44
      $region43: #{downsample.1} parent=31 // pred_region
        %s551 = smul.u32 14, %s18
      $region44: #{downsample.1} parent=31 // pred_fallthru
        _
      // Predicated region
      $region45: #{downsample.1} parent=31 // pred_check
        %p552 = pneg %p119
      $region46: #{downsample.1} parent=31 // pred_check_branch
        %554 = sbr.rel (%p552) target = $region48
      $region47: #{downsample.1} parent=31 // pred_region
        %s555 = smul.u32 14, %s18
        %p556 = scmp.lt.s32.totalorder %s555, 13
        %s557 = scalar_select %p556, %s555, 13
        %s558 = smul.addr %s557, 8
        %s559 = scalar_lea.vmem %s3, %s558
      $region48: #{downsample.1} parent=31 // pred_fallthru
        _
    $region32: #{downsample.1} parent=5 // pred_fallthru
      _
    %p560 = scmp.le.s32.totalorder 2, %s9
    // Predicated region
    $region49: #{downsample.1} parent=5 // pred_check
      %p561 = pneg %p560
    $region50: #{downsample.1} parent=5 // pred_check_branch
      %563 = sbr.rel (%p561) target = $region52
    $region51: #{downsample.1} parent=5 // pred_region
      %s564 = ssub.s32 %s9, 2
    $region52: #{downsample.1} parent=5 // pred_fallthru
      _
  $region6: #{downsample.1} parent=0 // loop_footer
    %s13 = sadd.s32 1, %s9
  $region7: #{downsample.1} parent=0 // loop_footer_branch
    %8 = sbr.rel target = $region3
  $region8: #{downsample.1} parent=0 // loop_exit
    _

</llo_original>
